<compile_context>
chip_gen: v7x
topology: tpu7x:2x2x1
jax: 0.10.0
libtpu: 0.0.40
codegen_flags: <defaults>
</compile_context>

<pallas_src>
import jax
import jax.numpy as jnp
from jax.experimental import pallas as pl
from jax.experimental.pallas import tpu as pltpu

BN_EPS = 1e-5


# --------------------------------------------------------------------------- kernel
def basemlp_kernel(x_ref, w_eff_ref, b_eff_ref, w2_ref, b2_ref, out_ref):
    # (TILE_B, F) @ (F, H) -> (TILE_B, H), f32 accumulation on the MXU.
    t = jnp.dot(x_ref[...], w_eff_ref[...],
                preferred_element_type=jnp.float32) + b_eff_ref[...]
    h = jnp.maximum(t, 0.0)                                   # ReLU (Dropout = identity, eval)
    # (TILE_B, H) @ (H, O) -> (TILE_B, O)
    out_ref[...] = (jnp.dot(h, w2_ref[...],
                            preferred_element_type=jnp.float32)
                    + b2_ref[...]).astype(out_ref.dtype)


# --------------------------------------------------------------------------- folding
def _fold_params(p):
    """Fold bottom + combine_views + towers.Linear(S->H) + eval BatchNorm into (W_eff, b_eff).

    z[b,s]   = sum_{v,d} x[b,v,s,d] * wc[v] * wb[d] + (bb*sum(wc) + bc)
    t[b,h]   = sum_s z[b,s] * w1[s,h] + b1[h]
    bn(t)    = t*scale + shift,  scale = gamma*rsqrt(var+eps), shift = beta - mean*scale
    =>  t_bn[b,h] = sum_{v,s,d} x[b,v,s,d] * W_eff[(v,s,d),h] + b_eff[h]
    """
    scale = p["gamma"] * jax.lax.rsqrt(p["var"] + BN_EPS)        # (1, H)
    shift = p["beta"] - p["mean"] * scale                        # (1, H)

    wc = p["wc"][:, 0]                                           # (V,)
    wb = p["wb"][0]                                              # (D,)
    w1 = p["w1"]                                                 # (S, H)
    V, D = wc.shape[0], wb.shape[0]
    S, H = w1.shape

    # W_eff[v, s, d, h] = wc[v] * w1[s, h] * wb[d] * scale[h]   -> (V*S*D, H)
    w_eff = (wc[:, None, None, None]
             * w1[None, :, None, :]
             * wb[None, None, :, None]
             * scale[0][None, None, None, :]).reshape(V * S * D, H)

    bias_z = p["bb"][0] * jnp.sum(wc) + p["bc"][0]
    b_eff = (bias_z * jnp.sum(w1, axis=0, keepdims=True) + p["b1"]) * scale + shift  # (1, H)
    return w_eff.astype(jnp.float32), b_eff.astype(jnp.float32)


# --------------------------------------------------------------------------- wrapper
def base_mlp_forward(x, params, *, tile_b=512):
    B, V, S, D = x.shape
    F = V * S * D
    H = params["w1"].shape[1]
    O = params["w2"].shape[1]

    w_eff, b_eff = _fold_params(params)
    w2 = params["w2"].astype(jnp.float32)
    b2 = params["b2"].astype(jnp.float32)

    # Free reshape: flattened (v, s, d) order matches W_eff's row order; minor dim F is
    # lane-dense (multiple of 128 for typical sizes) instead of the tiny sensor_dim.
    x2d = x.reshape(B, F)

    tile_b = min(tile_b, B)
    if B > 8:
        tile_b = max(8, (tile_b // 8) * 8)     # sublane-friendly batch tiles when possible
    grid = (pl.cdiv(B, tile_b),)

    flops = 2 * B * (F * H + H * O)
    bytes_accessed = int(B * F * x2d.dtype.itemsize
                         + (F * H + H + H * O + O) * 4
                         + B * O * 4)

    return pl.pallas_call(
        basemlp_kernel,
        out_shape=jax.ShapeDtypeStruct((B, O), jnp.float32),
        grid=grid,
        in_specs=[
            pl.BlockSpec((tile_b, F), lambda i: (i, 0)),   # x tile, pipelined over batch
            pl.BlockSpec((F, H), lambda i: (0, 0)),        # W_eff, VMEM-resident
            pl.BlockSpec((1, H), lambda i: (0, 0)),        # b_eff, resident
            pl.BlockSpec((H, O), lambda i: (0, 0)),        # w2, resident
            pl.BlockSpec((1, O), lambda i: (0, 0)),        # b2, resident
        ],
        out_specs=pl.BlockSpec((tile_b, O), lambda i: (i, 0)),
        compiler_params=pltpu.CompilerParams(
            dimension_semantics=("parallel",),             # megacore sharding on v7x
            vmem_limit_bytes=48 << 20,                     # under v7x's 64 MiB physical VMEM
        ),
        cost_estimate=pl.CostEstimate(flops=flops, transcendentals=0,
                                      bytes_accessed=bytes_accessed),
    )(x2d, w_eff, b_eff, w2, b2)


# --------------------------------------------------------------------------- params / reference
def init_params(key, num_views, seq_len, sensor_dim, hidden_dim, output_dim):
    """Deterministic init mimicking PyTorch nn.Linear (U[-1/sqrt(fan_in), 1/sqrt(fan_in)]).
    BN stats are made non-trivial so the eval-mode fold is actually exercised."""
    ks = jax.random.split(key, 12)

    def lin(kw, kb, fan_in, fan_out):
        bound = 1.0 / jnp.sqrt(fan_in)
        w = jax.random.uniform(kw, (fan_in, fan_out), jnp.float32, -bound, bound)
        b = jax.random.uniform(kb, (1, fan_out), jnp.float32, -bound, bound)
        return w, b

    wb, bb = lin(ks[0], ks[1], sensor_dim, 1)            # bottom
    wc, bc = lin(ks[2], ks[3], num_views, 1)             # combine_views
    w1, b1 = lin(ks[4], ks[5], seq_len, hidden_dim)      # towers.0
    w2, b2 = lin(ks[6], ks[7], hidden_dim, output_dim)   # towers.4

    return {
        "wb": wb.T, "bb": bb.reshape(1),                 # (1, D), (1,)
        "wc": wc,  "bc": bc.reshape(1),                  # (V, 1), (1,)
        "w1": w1,  "b1": b1,                             # (S, H), (1, H)
        "gamma": jax.random.uniform(ks[8], (1, hidden_dim), jnp.float32, 0.5, 1.5),
        "beta":  jax.random.uniform(ks[9], (1, hidden_dim), jnp.float32, -0.5, 0.5),
        "mean":  jax.random.uniform(ks[10], (1, hidden_dim), jnp.float32, -0.5, 0.5),
        "var":   jax.random.uniform(ks[11], (1, hidden_dim), jnp.float32, 0.5, 1.5),
        "w2": w2, "b2": b2,                              # (H, O), (1, O)
    }


def base_mlp_reference(x, p):
    """Pure-JAX reference mirroring the PyTorch forward (eval mode), unfused."""
    y = jnp.einsum("bvsd,d->bvs", x, p["wb"][0]) + p["bb"][0]     # bottom, squeeze(-1)
    z = jnp.einsum("bvs,v->bs", y, p["wc"][:, 0]) + p["bc"][0]    # combine_views, squeeze(-1)
    t = z @ p["w1"] + p["b1"]
    h = (t - p["mean"]) / jnp.sqrt(p["var"] + BN_EPS) * p["gamma"] + p["beta"]
    h = jnp.maximum(h, 0.0)
    return h @ p["w2"] + p["b2"]


# --------------------------------------------------------------------------- test
if __name__ == "__main__":
    batch, num_views, seq_len, sensor_dim = 2, 4, 16, 16
    hidden_dim, output_dim = 32, 8

    key = jax.random.PRNGKey(0)
    kx, kp = jax.random.split(key)
    x = jax.random.normal(kx, (batch, num_views, seq_len, sensor_dim), jnp.float32)
    params = init_params(kp, num_views, seq_len, sensor_dim, hidden_dim, output_dim)

    fwd = jax.jit(base_mlp_forward)
    out = jax.block_until_ready(fwd(x, params))

    ref = base_mlp_reference(x, params)
    assert out.shape == (batch, output_dim), out.shape
    assert jnp.allclose(out, ref, atol=1e-3, rtol=1e-3), (
        f"max abs err {jnp.max(jnp.abs(out - ref))}")

    print("KERNEL_OK")
</pallas_src>

<mosaic_0001>
module attributes {stable_mosaic.version = 11 : i64} {
  func.func @basemlp_kernel(%arg0: i32, %arg1: memref<2x1024xf32, #tpu.memory_space<vmem>>, %arg2: memref<1024x32xf32, #tpu.memory_space<vmem>>, %arg3: memref<1x32xf32, #tpu.memory_space<vmem>>, %arg4: memref<32x8xf32, #tpu.memory_space<vmem>>, %arg5: memref<1x8xf32, #tpu.memory_space<vmem>>, %arg6: memref<2x8xf32, #tpu.memory_space<vmem>>) attributes {dimension_semantics = [#tpu.dimension_semantics<parallel>], iteration_bounds = array<i64: 1>, scalar_prefetch = 0 : i64, scratch_operands = 0 : i64, tpu.core_type = #tpu.core_type<tc>, window_params = [{transform_indices = @transform_0, window_bounds = array<i64: 2, 1024>}, {pipeline_mode = #tpu.pipeline_mode<synchronous>, transform_indices = @transform_1, window_bounds = array<i64: 1024, 32>}, {pipeline_mode = #tpu.pipeline_mode<synchronous>, transform_indices = @transform_2, window_bounds = array<i64: 1, 32>}, {pipeline_mode = #tpu.pipeline_mode<synchronous>, transform_indices = @transform_3, window_bounds = array<i64: 32, 8>}, {pipeline_mode = #tpu.pipeline_mode<synchronous>, transform_indices = @transform_4, window_bounds = array<i64: 1, 8>}, {transform_indices = @transform_5, window_bounds = array<i64: 2, 8>}]} {
    %c0 = arith.constant 0 : index
    %c0_0 = arith.constant 0 : index
    %0 = vector.load %arg1[%c0, %c0_0] : memref<2x1024xf32, #tpu.memory_space<vmem>>, vector<2x1024xf32>
    %c0_1 = arith.constant 0 : index
    %c0_2 = arith.constant 0 : index
    %1 = vector.load %arg2[%c0_1, %c0_2] : memref<1024x32xf32, #tpu.memory_space<vmem>>, vector<1024x32xf32>
    %cst = arith.constant dense<0.000000e+00> : vector<2x32xf32>
    %2 = tpu.matmul %0, %1, %cst {dimension_numbers = #tpu.dot_dimension_numbers<[1], [0], [0], [1], [0, 0, 1, 1], [], []>} : vector<2x1024xf32>, vector<1024x32xf32>, vector<2x32xf32> -> vector<2x32xf32>
    %c0_3 = arith.constant 0 : index
    %c0_4 = arith.constant 0 : index
    %3 = vector.load %arg3[%c0_3, %c0_4] : memref<1x32xf32, #tpu.memory_space<vmem>>, vector<1x32xf32>
    %4 = vector.broadcast %3 : vector<1x32xf32> to vector<2x32xf32>
    %5 = arith.addf %2, %4 : vector<2x32xf32>
    %cst_5 = arith.constant 0.000000e+00 : f32
    %6 = vector.broadcast %cst_5 : f32 to vector<2x32xf32>
    %7 = arith.maximumf %5, %6 : vector<2x32xf32>
    %c0_6 = arith.constant 0 : index
    %c0_7 = arith.constant 0 : index
    %8 = vector.load %arg4[%c0_6, %c0_7] : memref<32x8xf32, #tpu.memory_space<vmem>>, vector<32x8xf32>
    %cst_8 = arith.constant dense<0.000000e+00> : vector<2x8xf32>
    %9 = tpu.matmul %7, %8, %cst_8 {dimension_numbers = #tpu.dot_dimension_numbers<[1], [0], [0], [1], [0, 0, 1, 1], [], []>} : vector<2x32xf32>, vector<32x8xf32>, vector<2x8xf32> -> vector<2x8xf32>
    %c0_9 = arith.constant 0 : index
    %c0_10 = arith.constant 0 : index
    %10 = vector.load %arg5[%c0_9, %c0_10] : memref<1x8xf32, #tpu.memory_space<vmem>>, vector<1x8xf32>
    %11 = vector.broadcast %10 : vector<1x8xf32> to vector<2x8xf32>
    %12 = arith.addf %9, %11 : vector<2x8xf32>
    %c0_11 = arith.constant 0 : index
    %c0_12 = arith.constant 0 : index
    %13 = vector.load %arg6[%c0_11, %c0_12] : memref<2x8xf32, #tpu.memory_space<vmem>>, vector<2x8xf32>
    tpu.vector_store %arg6[%c0_11, %c0_12], %12 {strides = array<i32>} : memref<2x8xf32, #tpu.memory_space<vmem>>, vector<2x8xf32>,
    return
  }
  func.func @transform_0(%arg0: i32) -> (i32, i32) {
    %c0_i32 = arith.constant 0 : i32
    %c0_i32_0 = arith.constant 0 : i32
    return %arg0, %c0_i32 : i32, i32
  }
  func.func @transform_1(%arg0: i32) -> (i32, i32) {
    %c0_i32 = arith.constant 0 : i32
    %c0_i32_0 = arith.constant 0 : i32
    %c0_i32_1 = arith.constant 0 : i32
    return %c0_i32, %c0_i32_0 : i32, i32
  }
  func.func @transform_2(%arg0: i32) -> (i32, i32) {
    %c0_i32 = arith.constant 0 : i32
    %c0_i32_0 = arith.constant 0 : i32
    %c0_i32_1 = arith.constant 0 : i32
    return %c0_i32, %c0_i32_0 : i32, i32
  }
  func.func @transform_3(%arg0: i32) -> (i32, i32) {
    %c0_i32 = arith.constant 0 : i32
    %c0_i32_0 = arith.constant 0 : i32
    %c0_i32_1 = arith.constant 0 : i32
    return %c0_i32, %c0_i32_0 : i32, i32
  }
  func.func @transform_4(%arg0: i32) -> (i32, i32) {
    %c0_i32 = arith.constant 0 : i32
    %c0_i32_0 = arith.constant 0 : i32
    %c0_i32_1 = arith.constant 0 : i32
    return %c0_i32, %c0_i32_0 : i32, i32
  }
  func.func @transform_5(%arg0: i32) -> (i32, i32) {
    %c0_i32 = arith.constant 0 : i32
    %c0_i32_0 = arith.constant 0 : i32
    return %arg0, %c0_i32 : i32, i32
  }
}

</mosaic_0001>

<llo_original>
// kernel: base_mlp_forward.1
$region0: #{base_mlp_forward.1}
  #allocation0 [shape = 'u32[]', space=smem, size = 0x4, offset = 0x4, fixed_abs, tag = 'smem constant byte address 0x4 - core index']
  #allocation1 [shape = 'u32[144,128]{1,0:T(1,128)}', space=vmem, size = 0x12000, scoped, tag = 'internal scratch']
  %s0 = inlined_call_operand.vmem [shape: f32[2,1024], index: 0, kind: input, shape index: {}]
  %s1 = inlined_call_operand.vmem [shape: f32[1024,32], index: 1, kind: input, shape index: {}]
  %s2 = inlined_call_operand.vmem [shape: f32[1,32], index: 2, kind: input, shape index: {}]
  %s3 = inlined_call_operand.vmem [shape: f32[32,8], index: 3, kind: input, shape index: {}]
  %s4 = inlined_call_operand.vmem [shape: f32[1,8], index: 4, kind: input, shape index: {}]
  %s5 = inlined_call_operand.hbm [shape: f32[2,8], index: 5, kind: output, shape index: {}]
  %s6 = sld [smem:[#allocation0]]
  $region30: #{base_mlp_forward.1} parent=0
    _
  %s8 = ssub.s32 1, %s6
  %s9 = scalar_select 0, %s8, %s6
  $region1: #{base_mlp_forward.1} parent=0
    #allocation2 [shape = 'u8[1024]{0}', space=vmem, size = 0x400, scoped, tag = 'output window, operand 0, single buffered']
    #allocation3 [shape = 's32[1]{0}', space=sflag, size = 0x4, scoped, tag = 'scoped memory for base_mlp_forward.1']
    %10 = vsyncpa [#allocation3], 0
    // Predicated region
    $region2: #{base_mlp_forward.1} parent=1 // pred_check
      _
    $region3: #{base_mlp_forward.1} parent=1 // pred_check_branch
      %12 = sbr.rel (0) target = $region5
    $region4: #{base_mlp_forward.1} parent=1 // pred_region
      _
    $region5: #{base_mlp_forward.1} parent=1 // pred_fallthru
      _
    // Predicated region
    $region6: #{base_mlp_forward.1} parent=1 // pred_check
      _
    $region7: #{base_mlp_forward.1} parent=1 // pred_check_branch
      %14 = sbr.rel (0) target = $region9
    $region8: #{base_mlp_forward.1} parent=1 // pred_region
      _
    $region9: #{base_mlp_forward.1} parent=1 // pred_fallthru
      _
    // Predicated region
    $region10: #{base_mlp_forward.1} parent=1 // pred_check
      _
    $region11: #{base_mlp_forward.1} parent=1 // pred_check_branch
      %16 = sbr.rel (0) target = $region13
    $region12: #{base_mlp_forward.1} parent=1 // pred_region
      _
    $region13: #{base_mlp_forward.1} parent=1 // pred_fallthru
      _
    // Predicated region
    $region14: #{base_mlp_forward.1} parent=1 // pred_check
      _
    $region15: #{base_mlp_forward.1} parent=1 // pred_check_branch
      %18 = sbr.rel (0) target = $region17
    $region16: #{base_mlp_forward.1} parent=1 // pred_region
      _
    $region17: #{base_mlp_forward.1} parent=1 // pred_fallthru
      _
    // Predicated region
    $region18: #{base_mlp_forward.1} parent=1 // pred_check
      _
    $region19: #{base_mlp_forward.1} parent=1 // pred_check_branch
      %20 = sbr.rel (0) target = $region21
    $region20: #{base_mlp_forward.1} parent=1 // pred_region
      _
    $region21: #{base_mlp_forward.1} parent=1 // pred_fallthru
      _
    %v21 = vld [vmem:[%s0] sm:$0xff]
    %v22 = vld [vmem:[%s0 + $0x8] sm:$0xff]
    %v23 = vld [vmem:[%s1] sm:$0xff]
    %v24 = vld [vmem:[%s1 + $0x8] sm:$0xff]
    %v25 = vld [vmem:[%s1 + $0x10] sm:$0xff]
    %v26 = vld [vmem:[%s1 + $0x18] sm:$0xff]
    %v27 = vld [vmem:[%s1 + $0x20] sm:$0xff]
    %v28 = vld [vmem:[%s1 + $0x28] sm:$0xff]
    %v29 = vld [vmem:[%s1 + $0x30] sm:$0xff]
    %v30 = vld [vmem:[%s1 + $0x38] sm:$0xff]
    %v31 = vld [vmem:[%s1 + $0x40] sm:$0xff]
    %v32 = vld [vmem:[%s1 + $0x48] sm:$0xff]
    %v33 = vld [vmem:[%s1 + $0x50] sm:$0xff]
    %v34 = vld [vmem:[%s1 + $0x58] sm:$0xff]
    %v35 = vld [vmem:[%s1 + $0x60] sm:$0xff]
    %v36 = vld [vmem:[%s1 + $0x68] sm:$0xff]
    %v37 = vld [vmem:[%s1 + $0x70] sm:$0xff]
    %v38 = vld [vmem:[%s1 + $0x78] sm:$0xff]
    %v39 = vld [vmem:[%s1 + $0x80] sm:$0xff]
    %v40 = vld [vmem:[%s1 + $0x88] sm:$0xff]
    %v41 = vld [vmem:[%s1 + $0x90] sm:$0xff]
    %v42 = vld [vmem:[%s1 + $0x98] sm:$0xff]
    %v43 = vld [vmem:[%s1 + $0xa0] sm:$0xff]
    %v44 = vld [vmem:[%s1 + $0xa8] sm:$0xff]
    %v45 = vld [vmem:[%s1 + $0xb0] sm:$0xff]
    %v46 = vld [vmem:[%s1 + $0xb8] sm:$0xff]
    %v47 = vld [vmem:[%s1 + $0xc0] sm:$0xff]
    %v48 = vld [vmem:[%s1 + $0xc8] sm:$0xff]
    %v49 = vld [vmem:[%s1 + $0xd0] sm:$0xff]
    %v50 = vld [vmem:[%s1 + $0xd8] sm:$0xff]
    %v51 = vld [vmem:[%s1 + $0xe0] sm:$0xff]
    %v52 = vld [vmem:[%s1 + $0xe8] sm:$0xff]
    %v53 = vld [vmem:[%s1 + $0xf0] sm:$0xff]
    %v54 = vld [vmem:[%s1 + $0xf8] sm:$0xff]
    %v55 = vld [vmem:[%s1 + $0x100] sm:$0xff]
    %v56 = vld [vmem:[%s1 + $0x108] sm:$0xff]
    %v57 = vld [vmem:[%s1 + $0x110] sm:$0xff]
    %v58 = vld [vmem:[%s1 + $0x118] sm:$0xff]
    %v59 = vld [vmem:[%s1 + $0x120] sm:$0xff]
    %v60 = vld [vmem:[%s1 + $0x128] sm:$0xff]
    %v61 = vld [vmem:[%s1 + $0x130] sm:$0xff]
    %v62 = vld [vmem:[%s1 + $0x138] sm:$0xff]
    %v63 = vld [vmem:[%s1 + $0x140] sm:$0xff]
    %v64 = vld [vmem:[%s1 + $0x148] sm:$0xff]
    %v65 = vld [vmem:[%s1 + $0x150] sm:$0xff]
    %v66 = vld [vmem:[%s1 + $0x158] sm:$0xff]
    %v67 = vld [vmem:[%s1 + $0x160] sm:$0xff]
    %v68 = vld [vmem:[%s1 + $0x168] sm:$0xff]
    %v69 = vld [vmem:[%s1 + $0x170] sm:$0xff]
    %v70 = vld [vmem:[%s1 + $0x178] sm:$0xff]
    %v71 = vld [vmem:[%s1 + $0x180] sm:$0xff]
    %v72 = vld [vmem:[%s1 + $0x188] sm:$0xff]
    %v73 = vld [vmem:[%s1 + $0x190] sm:$0xff]
    %v74 = vld [vmem:[%s1 + $0x198] sm:$0xff]
    %v75 = vld [vmem:[%s1 + $0x1a0] sm:$0xff]
    %v76 = vld [vmem:[%s1 + $0x1a8] sm:$0xff]
    %v77 = vld [vmem:[%s1 + $0x1b0] sm:$0xff]
    %v78 = vld [vmem:[%s1 + $0x1b8] sm:$0xff]
    %v79 = vld [vmem:[%s1 + $0x1c0] sm:$0xff]
    %v80 = vld [vmem:[%s1 + $0x1c8] sm:$0xff]
    %v81 = vld [vmem:[%s1 + $0x1d0] sm:$0xff]
    %v82 = vld [vmem:[%s1 + $0x1d8] sm:$0xff]
    %v83 = vld [vmem:[%s1 + $0x1e0] sm:$0xff]
    %v84 = vld [vmem:[%s1 + $0x1e8] sm:$0xff]
    %v85 = vld [vmem:[%s1 + $0x1f0] sm:$0xff]
    %v86 = vld [vmem:[%s1 + $0x1f8] sm:$0xff]
    %v87 = vld [vmem:[%s1 + $0x200] sm:$0xff]
    %v88 = vld [vmem:[%s1 + $0x208] sm:$0xff]
    %v89 = vld [vmem:[%s1 + $0x210] sm:$0xff]
    %v90 = vld [vmem:[%s1 + $0x218] sm:$0xff]
    %v91 = vld [vmem:[%s1 + $0x220] sm:$0xff]
    %v92 = vld [vmem:[%s1 + $0x228] sm:$0xff]
    %v93 = vld [vmem:[%s1 + $0x230] sm:$0xff]
    %v94 = vld [vmem:[%s1 + $0x238] sm:$0xff]
    %v95 = vld [vmem:[%s1 + $0x240] sm:$0xff]
    %v96 = vld [vmem:[%s1 + $0x248] sm:$0xff]
    %v97 = vld [vmem:[%s1 + $0x250] sm:$0xff]
    %v98 = vld [vmem:[%s1 + $0x258] sm:$0xff]
    %v99 = vld [vmem:[%s1 + $0x260] sm:$0xff]
    %v100 = vld [vmem:[%s1 + $0x268] sm:$0xff]
    %v101 = vld [vmem:[%s1 + $0x270] sm:$0xff]
    %v102 = vld [vmem:[%s1 + $0x278] sm:$0xff]
    %v103 = vld [vmem:[%s1 + $0x280] sm:$0xff]
    %v104 = vld [vmem:[%s1 + $0x288] sm:$0xff]
    %v105 = vld [vmem:[%s1 + $0x290] sm:$0xff]
    %v106 = vld [vmem:[%s1 + $0x298] sm:$0xff]
    %v107 = vld [vmem:[%s1 + $0x2a0] sm:$0xff]
    %v108 = vld [vmem:[%s1 + $0x2a8] sm:$0xff]
    %v109 = vld [vmem:[%s1 + $0x2b0] sm:$0xff]
    %v110 = vld [vmem:[%s1 + $0x2b8] sm:$0xff]
    %v111 = vld [vmem:[%s1 + $0x2c0] sm:$0xff]
    %v112 = vld [vmem:[%s1 + $0x2c8] sm:$0xff]
    %v113 = vld [vmem:[%s1 + $0x2d0] sm:$0xff]
    %v114 = vld [vmem:[%s1 + $0x2d8] sm:$0xff]
    %v115 = vld [vmem:[%s1 + $0x2e0] sm:$0xff]
    %v116 = vld [vmem:[%s1 + $0x2e8] sm:$0xff]
    %v117 = vld [vmem:[%s1 + $0x2f0] sm:$0xff]
    %v118 = vld [vmem:[%s1 + $0x2f8] sm:$0xff]
    %v119 = vld [vmem:[%s1 + $0x300] sm:$0xff]
    %v120 = vld [vmem:[%s1 + $0x308] sm:$0xff]
    %v121 = vld [vmem:[%s1 + $0x310] sm:$0xff]
    %v122 = vld [vmem:[%s1 + $0x318] sm:$0xff]
    %v123 = vld [vmem:[%s1 + $0x320] sm:$0xff]
    %v124 = vld [vmem:[%s1 + $0x328] sm:$0xff]
    %v125 = vld [vmem:[%s1 + $0x330] sm:$0xff]
    %v126 = vld [vmem:[%s1 + $0x338] sm:$0xff]
    %v127 = vld [vmem:[%s1 + $0x340] sm:$0xff]
    %v128 = vld [vmem:[%s1 + $0x348] sm:$0xff]
    %v129 = vld [vmem:[%s1 + $0x350] sm:$0xff]
    %v130 = vld [vmem:[%s1 + $0x358] sm:$0xff]
    %v131 = vld [vmem:[%s1 + $0x360] sm:$0xff]
    %v132 = vld [vmem:[%s1 + $0x368] sm:$0xff]
    %v133 = vld [vmem:[%s1 + $0x370] sm:$0xff]
    %v134 = vld [vmem:[%s1 + $0x378] sm:$0xff]
    %v135 = vld [vmem:[%s1 + $0x380] sm:$0xff]
    %v136 = vld [vmem:[%s1 + $0x388] sm:$0xff]
    %v137 = vld [vmem:[%s1 + $0x390] sm:$0xff]
    %v138 = vld [vmem:[%s1 + $0x398] sm:$0xff]
    %v139 = vld [vmem:[%s1 + $0x3a0] sm:$0xff]
    %v140 = vld [vmem:[%s1 + $0x3a8] sm:$0xff]
    %v141 = vld [vmem:[%s1 + $0x3b0] sm:$0xff]
    %v142 = vld [vmem:[%s1 + $0x3b8] sm:$0xff]
    %v143 = vld [vmem:[%s1 + $0x3c0] sm:$0xff]
    %v144 = vld [vmem:[%s1 + $0x3c8] sm:$0xff]
    %v145 = vld [vmem:[%s1 + $0x3d0] sm:$0xff]
    %v146 = vld [vmem:[%s1 + $0x3d8] sm:$0xff]
    %v147 = vld [vmem:[%s1 + $0x3e0] sm:$0xff]
    %v148 = vld [vmem:[%s1 + $0x3e8] sm:$0xff]
    %v149 = vld [vmem:[%s1 + $0x3f0] sm:$0xff]
    %v150 = vld [vmem:[%s1 + $0x3f8] sm:$0xff]
    %v151 = vld [vmem:[%s2] sm:$0x1]
    %v153 = vlaneseq
    %v154 = vshrl.u32 %v153, 7
    %v155 = vsub.s32 0, %v154
    %v156 = vrot.slane %v151, %v155
    %v160 = vcombine.high %v21, %v21
    %v162 = vunpack.c.l.s4 1983009808
    %v163 = vunpack.c.0.s8 %v162
    %v164 = vlaneseq
    %v165 = vshrl.u32 %v164, 7
    %v166 = vsub.s32 %v163, %v165
    %v167 = vrot.slane %v21, %v166
    %v169 = vunpack.c.l.s4 1983009808
    %v170 = vunpack.c.0.s8 %v169
    %v171 = vlaneseq
    %v172 = vshrl.u32 %v171, 7
    %v173 = vsub.s32 %v170, %v172
    %v174 = vrot.slane %v160, %v173
    %v175 = vcombine.high %v167, %v167
    %v176 = vcombine.high %v174, %v174
    %v177 = vcombine.high %v22, %v22
    %v179 = vunpack.c.l.s4 1983009808
    %v180 = vunpack.c.0.s8 %v179
    %v181 = vlaneseq
    %v182 = vshrl.u32 %v181, 7
    %v183 = vsub.s32 %v180, %v182
    %v184 = vrot.slane %v22, %v183
    %v186 = vunpack.c.l.s4 1983009808
    %v187 = vunpack.c.0.s8 %v186
    %v188 = vlaneseq
    %v189 = vshrl.u32 %v188, 7
    %v190 = vsub.s32 %v187, %v189
    %v191 = vrot.slane %v177, %v190
    %v192 = vcombine.high %v184, %v184
    %v193 = vcombine.high %v191, %v191
    %202 = vmatprep.subr.mxu0 0.0
    %203 = vmatpush1.msra.mxu0 %v23
    %204 = vmatprep.subr.mxu0 0.0
    %205 = vmatpush1.msra.mxu0 %v24
    %206 = vmatprep.subr.mxu0 0.0
    %207 = vmatpush1.msra.mxu0 %v25
    %208 = vmatprep.subr.mxu0 0.0
    %209 = vmatpush1.msra.mxu0 %v26
    %210 = vmatprep.subr.mxu0 0.0
    %211 = vmatpush1.msra.mxu0 %v27
    %212 = vmatprep.subr.mxu0 0.0
    %213 = vmatpush1.msra.mxu0 %v28
    %214 = vmatprep.subr.mxu0 0.0
    %215 = vmatpush1.msra.mxu0 %v29
    %216 = vmatprep.subr.mxu0 0.0
    %217 = vmatpush1.msra.mxu0 %v30
    %218 = vmatprep.subr.mxu0 0.0
    %219 = vmatpush1.msra.mxu0 %v31
    %220 = vmatprep.subr.mxu0 0.0
    %221 = vmatpush1.msra.mxu0 %v32
    %222 = vmatprep.subr.mxu0 0.0
    %223 = vmatpush1.msra.mxu0 %v33
    %224 = vmatprep.subr.mxu0 0.0
    %225 = vmatpush1.msra.mxu0 %v34
    %226 = vmatprep.subr.mxu0 0.0
    %227 = vmatpush1.msra.mxu0 %v35
    %228 = vmatprep.subr.mxu0 0.0
    %229 = vmatpush1.msra.mxu0 %v36
    %230 = vmatprep.subr.mxu0 0.0
    %231 = vmatpush1.msra.mxu0 %v37
    %232 = vmatprep.subr.mxu0 0.0
    %233 = vmatpush1.msra.mxu0 %v38
    %234 = vmatprep.subr.mxu0 0.0
    %235 = vmatpush1.msra.mxu0 %v39
    %236 = vmatprep.subr.mxu0 0.0
    %237 = vmatpush1.msra.mxu0 %v40
    %238 = vmatprep.subr.mxu0 0.0
    %239 = vmatpush1.msra.mxu0 %v41
    %240 = vmatprep.subr.mxu0 0.0
    %241 = vmatpush1.msra.mxu0 %v42
    %242 = vmatprep.subr.mxu0 0.0
    %243 = vmatpush1.msra.mxu0 %v43
    %244 = vmatprep.subr.mxu0 0.0
    %245 = vmatpush1.msra.mxu0 %v44
    %246 = vmatprep.subr.mxu0 0.0
    %247 = vmatpush1.msra.mxu0 %v45
    %248 = vmatprep.subr.mxu0 0.0
    %249 = vmatpush1.msra.mxu0 %v46
    %250 = vmatprep.subr.mxu0 0.0
    %251 = vmatpush1.msra.mxu0 %v47
    %252 = vmatprep.subr.mxu0 0.0
    %253 = vmatpush1.msra.mxu0 %v48
    %254 = vmatprep.subr.mxu0 0.0
    %255 = vmatpush1.msra.mxu0 %v49
    %256 = vmatprep.subr.mxu0 0.0
    %257 = vmatpush1.msra.mxu0 %v50
    %258 = vmatprep.subr.mxu0 0.0
    %259 = vmatpush1.msra.mxu0 %v51
    %260 = vmatprep.subr.mxu0 0.0
    %261 = vmatpush1.msra.mxu0 %v52
    %262 = vmatprep.subr.mxu0 0.0
    %263 = vmatpush1.msra.mxu0 %v53
    %264 = vmatprep.subr.mxu0 0.0
    %265 = vmatpush1.msra.mxu0 %v54
    %266 = vmatprep.mubr.f32.mxu0 %v175
    %267 = vmatmul.mubr.f32.gmra.mrb[0].mxu0 %v167
    %v268 = vpop.f32.mrb[0].mxu0
    %v269 = vadd.f32 %v156, %v268
    %v270 = vpop.f32.mrb[0].mxu0
    %271 = vdwg.mxu0
    %272 = vmatprep.subr.mxu0 0.0
    %273 = vmatpush1.msra.mxu0 %v55
    %274 = vmatprep.subr.mxu0 0.0
    %275 = vmatpush1.msra.mxu0 %v56
    %276 = vmatprep.subr.mxu0 0.0
    %277 = vmatpush1.msra.mxu0 %v57
    %278 = vmatprep.subr.mxu0 0.0
    %279 = vmatpush1.msra.mxu0 %v58
    %280 = vmatprep.subr.mxu0 0.0
    %281 = vmatpush1.msra.mxu0 %v59
    %282 = vmatprep.subr.mxu0 0.0
    %283 = vmatpush1.msra.mxu0 %v60
    %284 = vmatprep.subr.mxu0 0.0
    %285 = vmatpush1.msra.mxu0 %v61
    %286 = vmatprep.subr.mxu0 0.0
    %287 = vmatpush1.msra.mxu0 %v62
    %288 = vmatprep.subr.mxu0 0.0
    %289 = vmatpush1.msra.mxu0 %v63
    %290 = vmatprep.subr.mxu0 0.0
    %291 = vmatpush1.msra.mxu0 %v64
    %292 = vmatprep.subr.mxu0 0.0
    %293 = vmatpush1.msra.mxu0 %v65
    %294 = vmatprep.subr.mxu0 0.0
    %295 = vmatpush1.msra.mxu0 %v66
    %296 = vmatprep.subr.mxu0 0.0
    %297 = vmatpush1.msra.mxu0 %v67
    %298 = vmatprep.subr.mxu0 0.0
    %299 = vmatpush1.msra.mxu0 %v68
    %300 = vmatprep.subr.mxu0 0.0
    %301 = vmatpush1.msra.mxu0 %v69
    %302 = vmatprep.subr.mxu0 0.0
    %303 = vmatpush1.msra.mxu0 %v70
    %304 = vmatprep.subr.mxu0 0.0
    %305 = vmatpush1.msra.mxu0 %v71
    %306 = vmatprep.subr.mxu0 0.0
    %307 = vmatpush1.msra.mxu0 %v72
    %308 = vmatprep.subr.mxu0 0.0
    %309 = vmatpush1.msra.mxu0 %v73
    %310 = vmatprep.subr.mxu0 0.0
    %311 = vmatpush1.msra.mxu0 %v74
    %312 = vmatprep.subr.mxu0 0.0
    %313 = vmatpush1.msra.mxu0 %v75
    %314 = vmatprep.subr.mxu0 0.0
    %315 = vmatpush1.msra.mxu0 %v76
    %316 = vmatprep.subr.mxu0 0.0
    %317 = vmatpush1.msra.mxu0 %v77
    %318 = vmatprep.subr.mxu0 0.0
    %319 = vmatpush1.msra.mxu0 %v78
    %320 = vmatprep.subr.mxu0 0.0
    %321 = vmatpush1.msra.mxu0 %v79
    %322 = vmatprep.subr.mxu0 0.0
    %323 = vmatpush1.msra.mxu0 %v80
    %324 = vmatprep.subr.mxu0 0.0
    %325 = vmatpush1.msra.mxu0 %v81
    %326 = vmatprep.subr.mxu0 0.0
    %327 = vmatpush1.msra.mxu0 %v82
    %328 = vmatprep.subr.mxu0 0.0
    %329 = vmatpush1.msra.mxu0 %v83
    %330 = vmatprep.subr.mxu0 0.0
    %331 = vmatpush1.msra.mxu0 %v84
    %332 = vmatprep.subr.mxu0 0.0
    %333 = vmatpush1.msra.mxu0 %v85
    %334 = vmatprep.subr.mxu0 0.0
    %335 = vmatpush1.msra.mxu0 %v86
    %336 = vmatprep.mubr.f32.mxu0 %v176
    %337 = vmatmul.mubr.f32.gmra.mrb[0].mxu0 %v174
    %v338 = vpop.f32.mrb[0].mxu0
    %v339 = vadd.f32 %v269, %v338
    %v340 = vpop.f32.mrb[0].mxu0
    %341 = vdwg.mxu0
    %342 = vmatprep.subr.mxu0 0.0
    %343 = vmatpush1.msra.mxu0 %v87
    %344 = vmatprep.subr.mxu0 0.0
    %345 = vmatpush1.msra.mxu0 %v88
    %346 = vmatprep.subr.mxu0 0.0
    %347 = vmatpush1.msra.mxu0 %v89
    %348 = vmatprep.subr.mxu0 0.0
    %349 = vmatpush1.msra.mxu0 %v90
    %350 = vmatprep.subr.mxu0 0.0
    %351 = vmatpush1.msra.mxu0 %v91
    %352 = vmatprep.subr.mxu0 0.0
    %353 = vmatpush1.msra.mxu0 %v92
    %354 = vmatprep.subr.mxu0 0.0
    %355 = vmatpush1.msra.mxu0 %v93
    %356 = vmatprep.subr.mxu0 0.0
    %357 = vmatpush1.msra.mxu0 %v94
    %358 = vmatprep.subr.mxu0 0.0
    %359 = vmatpush1.msra.mxu0 %v95
    %360 = vmatprep.subr.mxu0 0.0
    %361 = vmatpush1.msra.mxu0 %v96
    %362 = vmatprep.subr.mxu0 0.0
    %363 = vmatpush1.msra.mxu0 %v97
    %364 = vmatprep.subr.mxu0 0.0
    %365 = vmatpush1.msra.mxu0 %v98
    %366 = vmatprep.subr.mxu0 0.0
    %367 = vmatpush1.msra.mxu0 %v99
    %368 = vmatprep.subr.mxu0 0.0
    %369 = vmatpush1.msra.mxu0 %v100
    %370 = vmatprep.subr.mxu0 0.0
    %371 = vmatpush1.msra.mxu0 %v101
    %372 = vmatprep.subr.mxu0 0.0
    %373 = vmatpush1.msra.mxu0 %v102
    %374 = vmatprep.subr.mxu0 0.0
    %375 = vmatpush1.msra.mxu0 %v103
    %376 = vmatprep.subr.mxu0 0.0
    %377 = vmatpush1.msra.mxu0 %v104
    %378 = vmatprep.subr.mxu0 0.0
    %379 = vmatpush1.msra.mxu0 %v105
    %380 = vmatprep.subr.mxu0 0.0
    %381 = vmatpush1.msra.mxu0 %v106
    %382 = vmatprep.subr.mxu0 0.0
    %383 = vmatpush1.msra.mxu0 %v107
    %384 = vmatprep.subr.mxu0 0.0
    %385 = vmatpush1.msra.mxu0 %v108
    %386 = vmatprep.subr.mxu0 0.0
    %387 = vmatpush1.msra.mxu0 %v109
    %388 = vmatprep.subr.mxu0 0.0
    %389 = vmatpush1.msra.mxu0 %v110
    %390 = vmatprep.subr.mxu0 0.0
    %391 = vmatpush1.msra.mxu0 %v111
    %392 = vmatprep.subr.mxu0 0.0
    %393 = vmatpush1.msra.mxu0 %v112
    %394 = vmatprep.subr.mxu0 0.0
    %395 = vmatpush1.msra.mxu0 %v113
    %396 = vmatprep.subr.mxu0 0.0
    %397 = vmatpush1.msra.mxu0 %v114
    %398 = vmatprep.subr.mxu0 0.0
    %399 = vmatpush1.msra.mxu0 %v115
    %400 = vmatprep.subr.mxu0 0.0
    %401 = vmatpush1.msra.mxu0 %v116
    %402 = vmatprep.subr.mxu0 0.0
    %403 = vmatpush1.msra.mxu0 %v117
    %404 = vmatprep.subr.mxu0 0.0
    %405 = vmatpush1.msra.mxu0 %v118
    %406 = vmatprep.mubr.f32.mxu0 %v192
    %407 = vmatmul.mubr.f32.gmra.mrb[0].mxu0 %v184
    %v408 = vpop.f32.mrb[0].mxu0
    %v409 = vadd.f32 %v339, %v408
    %v410 = vpop.f32.mrb[0].mxu0
    %411 = vdwg.mxu0
    %412 = vmatprep.subr.mxu0 0.0
    %413 = vmatpush1.msra.mxu0 %v119
    %414 = vmatprep.subr.mxu0 0.0
    %415 = vmatpush1.msra.mxu0 %v120
    %416 = vmatprep.subr.mxu0 0.0
    %417 = vmatpush1.msra.mxu0 %v121
    %418 = vmatprep.subr.mxu0 0.0
    %419 = vmatpush1.msra.mxu0 %v122
    %420 = vmatprep.subr.mxu0 0.0
    %421 = vmatpush1.msra.mxu0 %v123
    %422 = vmatprep.subr.mxu0 0.0
    %423 = vmatpush1.msra.mxu0 %v124
    %424 = vmatprep.subr.mxu0 0.0
    %425 = vmatpush1.msra.mxu0 %v125
    %426 = vmatprep.subr.mxu0 0.0
    %427 = vmatpush1.msra.mxu0 %v126
    %428 = vmatprep.subr.mxu0 0.0
    %429 = vmatpush1.msra.mxu0 %v127
    %430 = vmatprep.subr.mxu0 0.0
    %431 = vmatpush1.msra.mxu0 %v128
    %432 = vmatprep.subr.mxu0 0.0
    %433 = vmatpush1.msra.mxu0 %v129
    %434 = vmatprep.subr.mxu0 0.0
    %435 = vmatpush1.msra.mxu0 %v130
    %436 = vmatprep.subr.mxu0 0.0
    %437 = vmatpush1.msra.mxu0 %v131
    %438 = vmatprep.subr.mxu0 0.0
    %439 = vmatpush1.msra.mxu0 %v132
    %440 = vmatprep.subr.mxu0 0.0
    %441 = vmatpush1.msra.mxu0 %v133
    %442 = vmatprep.subr.mxu0 0.0
    %443 = vmatpush1.msra.mxu0 %v134
    %444 = vmatprep.subr.mxu0 0.0
    %445 = vmatpush1.msra.mxu0 %v135
    %446 = vmatprep.subr.mxu0 0.0
    %447 = vmatpush1.msra.mxu0 %v136
    %448 = vmatprep.subr.mxu0 0.0
    %449 = vmatpush1.msra.mxu0 %v137
    %450 = vmatprep.subr.mxu0 0.0
    %451 = vmatpush1.msra.mxu0 %v138
    %452 = vmatprep.subr.mxu0 0.0
    %453 = vmatpush1.msra.mxu0 %v139
    %454 = vmatprep.subr.mxu0 0.0
    %455 = vmatpush1.msra.mxu0 %v140
    %456 = vmatprep.subr.mxu0 0.0
    %457 = vmatpush1.msra.mxu0 %v141
    %458 = vmatprep.subr.mxu0 0.0
    %459 = vmatpush1.msra.mxu0 %v142
    %460 = vmatprep.subr.mxu0 0.0
    %461 = vmatpush1.msra.mxu0 %v143
    %462 = vmatprep.subr.mxu0 0.0
    %463 = vmatpush1.msra.mxu0 %v144
    %464 = vmatprep.subr.mxu0 0.0
    %465 = vmatpush1.msra.mxu0 %v145
    %466 = vmatprep.subr.mxu0 0.0
    %467 = vmatpush1.msra.mxu0 %v146
    %468 = vmatprep.subr.mxu0 0.0
    %469 = vmatpush1.msra.mxu0 %v147
    %470 = vmatprep.subr.mxu0 0.0
    %471 = vmatpush1.msra.mxu0 %v148
    %472 = vmatprep.subr.mxu0 0.0
    %473 = vmatpush1.msra.mxu0 %v149
    %474 = vmatprep.subr.mxu0 0.0
    %475 = vmatpush1.msra.mxu0 %v150
    %476 = vmatprep.mubr.f32.mxu0 %v193
    %477 = vmatmul.mubr.f32.gmra.mrb[0].mxu0 %v191
    %v478 = vpop.f32.mrb[0].mxu0
    %v479 = vadd.f32 %v409, %v478
    %v480 = vpop.f32.mrb[0].mxu0
    %481 = vdwg.mxu0
    %v482 = vmax.f32 %v479, 0.0
    %v483 = vld [vmem:[%s3] sm:$0xff]
    %v484 = vld [vmem:[%s3 + $0x8] sm:$0xff]
    %v485 = vld [vmem:[%s3 + $0x10] sm:$0xff]
    %v486 = vld [vmem:[%s3 + $0x18] sm:$0xff]
    %v487 = vld [vmem:[%s4] sm:$0x1]
    %v489 = vlaneseq
    %v490 = vshrl.u32 %v489, 7
    %v491 = vsub.s32 0, %v490
    %v492 = vrot.slane %v487, %v491
    %vm494 = vcmask 261120
    %v496 = vsel %vm494, %v482, 0
    %498 = vmatprep.subr.mxu0 0.0
    %499 = vmatpush1.msra.mxu0 %v483
    %500 = vmatprep.subr.mxu0 0.0
    %501 = vmatpush1.msra.mxu0 %v484
    %502 = vmatprep.subr.mxu0 0.0
    %503 = vmatpush1.msra.mxu0 %v485
    %504 = vmatprep.subr.mxu0 0.0
    %505 = vmatpush1.msra.mxu0 %v486
    %506 = vmatprep.subr.mxu0 0.0
    %507 = vmatpush1.msra.mxu0 0.0
    %508 = vmatprep.subr.mxu0 0.0
    %509 = vmatpush1.msra.mxu0 0.0
    %510 = vmatprep.subr.mxu0 0.0
    %511 = vmatpush1.msra.mxu0 0.0
    %512 = vmatprep.subr.mxu0 0.0
    %513 = vmatpush1.msra.mxu0 0.0
    %514 = vmatprep.subr.mxu0 0.0
    %515 = vmatpush1.msra.mxu0 0.0
    %516 = vmatprep.subr.mxu0 0.0
    %517 = vmatpush1.msra.mxu0 0.0
    %518 = vmatprep.subr.mxu0 0.0
    %519 = vmatpush1.msra.mxu0 0.0
    %520 = vmatprep.subr.mxu0 0.0
    %521 = vmatpush1.msra.mxu0 0.0
    %522 = vmatprep.subr.mxu0 0.0
    %523 = vmatpush1.msra.mxu0 0.0
    %524 = vmatprep.subr.mxu0 0.0
    %525 = vmatpush1.msra.mxu0 0.0
    %526 = vmatprep.subr.mxu0 0.0
    %527 = vmatpush1.msra.mxu0 0.0
    %528 = vmatprep.subr.mxu0 0.0
    %529 = vmatpush1.msra.mxu0 0.0
    %530 = vmatprep.subr.mxu0 0.0
    %531 = vmatpush1.msra.mxu0 0.0
    %532 = vmatprep.subr.mxu0 0.0
    %533 = vmatpush1.msra.mxu0 0.0
    %534 = vmatprep.subr.mxu0 0.0
    %535 = vmatpush1.msra.mxu0 0.0
    %536 = vmatprep.subr.mxu0 0.0
    %537 = vmatpush1.msra.mxu0 0.0
    %538 = vmatprep.subr.mxu0 0.0
    %539 = vmatpush1.msra.mxu0 0.0
    %540 = vmatprep.subr.mxu0 0.0
    %541 = vmatpush1.msra.mxu0 0.0
    %542 = vmatprep.subr.mxu0 0.0
    %543 = vmatpush1.msra.mxu0 0.0
    %544 = vmatprep.subr.mxu0 0.0
    %545 = vmatpush1.msra.mxu0 0.0
    %546 = vmatprep.subr.mxu0 0.0
    %547 = vmatpush1.msra.mxu0 0.0
    %548 = vmatprep.subr.mxu0 0.0
    %549 = vmatpush1.msra.mxu0 0.0
    %550 = vmatprep.subr.mxu0 0.0
    %551 = vmatpush1.msra.mxu0 0.0
    %552 = vmatprep.subr.mxu0 0.0
    %553 = vmatpush1.msra.mxu0 0.0
    %554 = vmatprep.subr.mxu0 0.0
    %555 = vmatpush1.msra.mxu0 0.0
    %556 = vmatprep.subr.mxu0 0.0
    %557 = vmatpush1.msra.mxu0 0.0
    %558 = vmatprep.subr.mxu0 0.0
    %559 = vmatpush1.msra.mxu0 0.0
    %560 = vmatprep.subr.mxu0 0.0
    %561 = vmatpush1.msra.mxu0 0.0
    %562 = vmatprep.mubr.f32.mxu0 0.0
    %563 = vmatmul.mubr.f32.gmra.mrb[0].mxu0 %v496
    %v564 = vpop.f32.mrb[0].mxu0
    %v565 = vadd.f32 %v492, %v564
    %v566 = vpop.f32.mrb[0].mxu0
    %567 = vdwg.mxu0
    %vm568 = vcmask 58368
    %569 = vst.msk [vmem:[#allocation2] sm:$0x3] %vm568, %v565
    // Predicated region
    $region22: #{base_mlp_forward.1} parent=1 // pred_check
      _
    $region23: #{base_mlp_forward.1} parent=1 // pred_check_branch
      %571 = sbr.rel (0) target = $region25
    $region24: #{base_mlp_forward.1} parent=1 // pred_region
      %s573 = ssub.s32 32, 32
      %574 = vsyncadd [#allocation3], %s573
      %s576 = sshll.u32 [#allocation2], 4
      %s577 = int_to_ptr.vmem [resolvable:$true] %s576
      %579 = dma.vmem_to_hbm [thread:$0]  %s577, 32, %s5, [#allocation3]
    $region25: #{base_mlp_forward.1} parent=1 // pred_fallthru
      _
    // Predicated region
    $region26: #{base_mlp_forward.1} parent=1 // pred_check
      _
    $region27: #{base_mlp_forward.1} parent=1 // pred_check_branch
      %581 = sbr.rel (0) target = $region29
    $region28: #{base_mlp_forward.1} parent=1 // pred_region
      %582 = dma.done [#allocation3], 32
    $region29: #{base_mlp_forward.1} parent=1 // pred_fallthru
      _
    %583 = vsyncpa [#allocation3], 1

</llo_original>
